<compile_context>
chip_gen: v5e
topology: v5e:2x2
jax: 0.10.0
libtpu: 0.0.40
codegen_flags: <defaults>
</compile_context>

<pallas_src>
import jax
import jax.numpy as jnp
from jax.experimental import pallas as pl
from jax.experimental.pallas import tpu as pltpu


def _round_up(x, m):
    return ((x + m - 1) // m) * m


def _orthogonal(key, rows, cols, gain=0.01, dtype=jnp.float32):
    """Deterministic orthogonal init matching torch.nn.init.orthogonal_ semantics."""
    transpose = rows < cols
    shape = (cols, rows) if transpose else (rows, cols)
    a = jax.random.normal(key, shape, dtype=jnp.float32)
    q, r = jnp.linalg.qr(a)
    d = jnp.sign(jnp.diagonal(r))
    q = q * d[None, :]
    if transpose:
        q = q.T
    return (gain * q).astype(dtype)


def _policy_kernel(state_ref, w1_ref, b1_ref, wh_ref, pack_ref, out_ref):
    # hidden = relu(state @ W1 + b1): bf16 MXU matmul, f32 bias/ReLU epilogue on the
    # VPU, cast back to bf16 fused before the second matmul.
    x = jnp.dot(state_ref[...].astype(jnp.bfloat16), w1_ref[...],
                preferred_element_type=jnp.float32)
    x = jnp.maximum(x + b1_ref[...], 0.0).astype(jnp.bfloat16)

    # all heads fused into one matmul: y = x @ W_heads + b_heads
    y = jnp.dot(x, wh_ref[...], preferred_element_type=jnp.float32)
    y = y + pack_ref[0:1, :]                                   # fused head biases
    # per-column clamp: lo/hi are -inf/+inf except on the log_std columns (-20 / 2)
    y = jnp.minimum(jnp.maximum(y, pack_ref[1:2, :]), pack_ref[2:3, :])

    out_ref[...] = y.astype(out_ref.dtype)


class PolicyNetworkPallas:
    """JAX/Pallas re-implementation of PolicyNetwork.forward."""

    def __init__(self, state_dim, continuous_action_dim, discrete_action_dims,
                 hidden_dim=64, key=None):
        self.state_dim = state_dim
        self.continuous_action_dim = continuous_action_dim
        self.discrete_action_dims = list(discrete_action_dims)
        self.hidden_dim = hidden_dim

        if key is None:
            key = jax.random.PRNGKey(0)
        keys = jax.random.split(key, 4 + len(self.discrete_action_dims))

        # ---- fc1: (state_dim -> hidden_dim), stored transposed as (in, out) ----
        w1 = _orthogonal(keys[0], hidden_dim, state_dim).T            # (state_dim, hidden)
        b1 = jnp.zeros((hidden_dim,), jnp.float32)

        # ---- heads, concatenated along the output axis ----
        head_ws, head_bs, head_dims = [], [], []
        if continuous_action_dim > 0:
            head_ws.append(_orthogonal(keys[1], continuous_action_dim, hidden_dim).T)
            head_bs.append(jnp.zeros((continuous_action_dim,), jnp.float32))
            head_dims.append(continuous_action_dim)                   # means
            head_ws.append(_orthogonal(keys[2], continuous_action_dim, hidden_dim).T)
            head_bs.append(jnp.zeros((continuous_action_dim,), jnp.float32))
            head_dims.append(continuous_action_dim)                   # log_stds
        for i, dim in enumerate(self.discrete_action_dims):
            head_ws.append(_orthogonal(keys[3 + i], dim, hidden_dim).T)
            head_bs.append(jnp.zeros((dim,), jnp.float32))
            head_dims.append(dim)

        self.head_dims = head_dims
        self.total_out = int(sum(head_dims))
        assert self.total_out > 0, "PolicyNetwork needs at least one action head"

        w_heads = jnp.concatenate(head_ws, axis=1)                    # (hidden, total_out)
        b_heads = jnp.concatenate(head_bs, axis=0)                    # (total_out,)

        # ---- hidden padded to a lane-dense width; output stays UNPADDED ----
        # (out block's last dim equals the full array dim, so no lane padding needed;
        #  do NOT pad h_pad/out further — the MXU has huge slack here.)
        self.h_pad = _round_up(hidden_dim, 128)

        w1_p = jnp.zeros((state_dim, self.h_pad), jnp.float32).at[:, :hidden_dim].set(w1)
        b1_p = jnp.zeros((1, self.h_pad), jnp.float32).at[0, :hidden_dim].set(b1)
        wh_p = (jnp.zeros((self.h_pad, self.total_out), jnp.float32)
                .at[:hidden_dim, :].set(w_heads))

        # bf16 MXU inputs; biases / bounds stay f32 for the epilogue
        self.w1 = w1_p.astype(jnp.bfloat16)
        self.b1 = b1_p
        self.w_heads = wh_p.astype(jnp.bfloat16)

        # pack = [head biases ; clamp lo ; clamp hi] in one resident (3, total_out) operand
        lo = jnp.full((self.total_out,), -jnp.inf, jnp.float32)
        hi = jnp.full((self.total_out,), jnp.inf, jnp.float32)
        if continuous_action_dim > 0:
            lo = lo.at[continuous_action_dim:2 * continuous_action_dim].set(-20.0)
            hi = hi.at[continuous_action_dim:2 * continuous_action_dim].set(2.0)
        self.pack = jnp.stack([b_heads, lo, hi], axis=0)               # (3, total_out)

    def __call__(self, state):
        B = state.shape[0]
        sd = self.state_dim
        state = state.astype(jnp.float32)      # bf16 cast happens inside the kernel

        # Batch tile: big enough to amortize per-step overhead (cap 4096), small
        # enough that medium batches still produce >= 2 tiles for v7x megacore.
        if B <= 8:
            TB = B                              # block == full batch dim (legal)
        else:
            TB = min(4096, _round_up(pl.cdiv(B, 2), 8))
        n_tiles = pl.cdiv(B, TB)                # ragged last tile handled by Pallas

        flops = 2 * B * (sd * self.h_pad + self.h_pad * self.total_out)
        bytes_accessed = (B * sd * 4
                          + self.w1.size * 2 + self.b1.size * 4
                          + self.w_heads.size * 2 + self.pack.size * 4
                          + B * self.total_out * 4)

        const = lambda i: (0, 0)   # resident operands: same block every grid step
        y = pl.pallas_call(
            _policy_kernel,
            out_shape=jax.ShapeDtypeStruct((B, self.total_out), jnp.float32),
            grid=(n_tiles,),
            in_specs=[
                pl.BlockSpec((TB, sd), lambda i: (i, 0)),               # state (tiled)
                pl.BlockSpec((sd, self.h_pad), const),                  # W1
                pl.BlockSpec((1, self.h_pad), const),                   # b1
                pl.BlockSpec((self.h_pad, self.total_out), const),      # W_heads
                pl.BlockSpec((3, self.total_out), const),               # [b_h; lo; hi]
            ],
            out_specs=pl.BlockSpec((TB, self.total_out), lambda i: (i, 0)),
            compiler_params=pltpu.CompilerParams(
                dimension_semantics=("parallel",),
                vmem_limit_bytes=32 * 1024 * 1024,   # explicit: safe on v5e/v6e/v7x
            ),
            cost_estimate=pl.CostEstimate(
                flops=flops, transcendentals=0, bytes_accessed=bytes_accessed),
        )(state, self.w1, self.b1, self.w_heads, self.pack)

        # split back into the PyTorch tuple structure
        outputs = []
        off = 0
        if self.continuous_action_dim > 0:
            means = y[:, off:off + self.continuous_action_dim]
            off += self.continuous_action_dim
            log_stds = y[:, off:off + self.continuous_action_dim]
            off += self.continuous_action_dim
            outputs.append((means, log_stds))
        for dim in self.discrete_action_dims:
            outputs.append(y[:, off:off + dim])
            off += dim
        return tuple(outputs)

    # pure-JAX reference with the same bf16 weights (for testing)
    def reference(self, state):
        x = jnp.dot(state.astype(jnp.bfloat16), self.w1,
                    preferred_element_type=jnp.float32)
        x = jnp.maximum(x + self.b1, 0.0).astype(jnp.bfloat16)
        y = jnp.dot(x, self.w_heads, preferred_element_type=jnp.float32)
        y = y + self.pack[0:1, :]
        y = jnp.minimum(jnp.maximum(y, self.pack[1:2, :]), self.pack[2:3, :])
        return y


if __name__ == "__main__":
    key = jax.random.PRNGKey(0)
    k_params, k_state = jax.random.split(key)

    batch = 2
    state_dim = 8
    hidden_dim = 32
    continuous_action_dim = 3
    discrete_action_dims = [4, 5]

    net = PolicyNetworkPallas(state_dim, continuous_action_dim,
                              discrete_action_dims, hidden_dim, key=k_params)
    state = jax.random.normal(k_state, (batch, state_dim), jnp.float32)

    outputs = net(state)
    outputs = jax.block_until_ready(outputs)

    # shape / clamp semantics checks
    (means, log_stds) = outputs[0]
    assert means.shape == (batch, continuous_action_dim)
    assert log_stds.shape == (batch, continuous_action_dim)
    assert bool(jnp.all(log_stds <= 2.0)) and bool(jnp.all(log_stds >= -20.0))
    for i, dim in enumerate(discrete_action_dims):
        assert outputs[1 + i].shape == (batch, dim)
    assert bool(jnp.all(jnp.isfinite(means)))

    # numeric check against a pure-JAX reference using the same bf16 weights
    ref = net.reference(state)
    got = jnp.concatenate(
        [jnp.concatenate(outputs[0], axis=1)] + list(outputs[1:]), axis=1)
    assert bool(jnp.allclose(got, ref, rtol=1e-3, atol=1e-5)), "mismatch vs reference"

    print("KERNEL_OK")
</pallas_src>

<mosaic_0001>
module attributes {stable_mosaic.version = 11 : i64} {
  func.func @_policy_kernel(%arg0: i32, %arg1: memref<2x8xf32, #tpu.memory_space<vmem>>, %arg2: memref<8x128xbf16, #tpu.memory_space<vmem>>, %arg3: memref<1x128xf32, #tpu.memory_space<vmem>>, %arg4: memref<128x15xbf16, #tpu.memory_space<vmem>>, %arg5: memref<3x15xf32, #tpu.memory_space<vmem>>, %arg6: memref<2x15xf32, #tpu.memory_space<vmem>>) attributes {dimension_semantics = [#tpu.dimension_semantics<parallel>], iteration_bounds = array<i64: 1>, scalar_prefetch = 0 : i64, scratch_operands = 0 : i64, tpu.core_type = #tpu.core_type<tc>, window_params = [{transform_indices = @transform_0, window_bounds = array<i64: 2, 8>}, {pipeline_mode = #tpu.pipeline_mode<synchronous>, transform_indices = @transform_1, window_bounds = array<i64: 8, 128>}, {pipeline_mode = #tpu.pipeline_mode<synchronous>, transform_indices = @transform_2, window_bounds = array<i64: 1, 128>}, {pipeline_mode = #tpu.pipeline_mode<synchronous>, transform_indices = @transform_3, window_bounds = array<i64: 128, 15>}, {pipeline_mode = #tpu.pipeline_mode<synchronous>, transform_indices = @transform_4, window_bounds = array<i64: 3, 15>}, {transform_indices = @transform_5, window_bounds = array<i64: 2, 15>}]} {
    %c0 = arith.constant 0 : index
    %c0_0 = arith.constant 0 : index
    %0 = vector.load %arg1[%c0, %c0_0] : memref<2x8xf32, #tpu.memory_space<vmem>>, vector<2x8xf32>
    %1 = arith.truncf %0 : vector<2x8xf32> to vector<2x8xbf16>
    %c0_1 = arith.constant 0 : index
    %c0_2 = arith.constant 0 : index
    %2 = vector.load %arg2[%c0_1, %c0_2] : memref<8x128xbf16, #tpu.memory_space<vmem>>, vector<8x128xbf16>
    %cst = arith.constant dense<0.000000e+00> : vector<2x128xf32>
    %3 = tpu.matmul %1, %2, %cst {dimension_numbers = #tpu.dot_dimension_numbers<[1], [0], [0], [1], [0, 0, 1, 1], [], []>} : vector<2x8xbf16>, vector<8x128xbf16>, vector<2x128xf32> -> vector<2x128xf32>
    %c0_3 = arith.constant 0 : index
    %c0_4 = arith.constant 0 : index
    %4 = vector.load %arg3[%c0_3, %c0_4] : memref<1x128xf32, #tpu.memory_space<vmem>>, vector<1x128xf32>
    %5 = vector.broadcast %4 : vector<1x128xf32> to vector<2x128xf32>
    %6 = arith.addf %3, %5 : vector<2x128xf32>
    %cst_5 = arith.constant 0.000000e+00 : f32
    %7 = vector.broadcast %cst_5 : f32 to vector<2x128xf32>
    %8 = arith.maximumf %6, %7 : vector<2x128xf32>
    %9 = arith.truncf %8 : vector<2x128xf32> to vector<2x128xbf16>
    %c0_6 = arith.constant 0 : index
    %c0_7 = arith.constant 0 : index
    %10 = vector.load %arg4[%c0_6, %c0_7] : memref<128x15xbf16, #tpu.memory_space<vmem>>, vector<128x15xbf16>
    %cst_8 = arith.constant dense<0.000000e+00> : vector<2x15xf32>
    %11 = tpu.matmul %9, %10, %cst_8 {dimension_numbers = #tpu.dot_dimension_numbers<[1], [0], [0], [1], [0, 0, 1, 1], [], []>} : vector<2x128xbf16>, vector<128x15xbf16>, vector<2x15xf32> -> vector<2x15xf32>
    %c0_9 = arith.constant 0 : index
    %c0_10 = arith.constant 0 : index
    %12 = vector.load %arg5[%c0_9, %c0_10] : memref<3x15xf32, #tpu.memory_space<vmem>>, vector<1x15xf32>
    %13 = vector.broadcast %12 : vector<1x15xf32> to vector<2x15xf32>
    %14 = arith.addf %11, %13 : vector<2x15xf32>
    %c1 = arith.constant 1 : index
    %c0_11 = arith.constant 0 : index
    %15 = vector.load %arg5[%c1, %c0_11] : memref<3x15xf32, #tpu.memory_space<vmem>>, vector<1x15xf32>
    %16 = vector.broadcast %15 : vector<1x15xf32> to vector<2x15xf32>
    %17 = arith.maximumf %14, %16 : vector<2x15xf32>
    %c2 = arith.constant 2 : index
    %c0_12 = arith.constant 0 : index
    %18 = vector.load %arg5[%c2, %c0_12] : memref<3x15xf32, #tpu.memory_space<vmem>>, vector<1x15xf32>
    %19 = vector.broadcast %18 : vector<1x15xf32> to vector<2x15xf32>
    %20 = arith.minimumf %17, %19 : vector<2x15xf32>
    %c0_13 = arith.constant 0 : index
    %c0_14 = arith.constant 0 : index
    %21 = vector.load %arg6[%c0_13, %c0_14] : memref<2x15xf32, #tpu.memory_space<vmem>>, vector<2x15xf32>
    tpu.vector_store %arg6[%c0_13, %c0_14], %20 {strides = array<i32>} : memref<2x15xf32, #tpu.memory_space<vmem>>, vector<2x15xf32>,
    return
  }
  func.func @transform_0(%arg0: i32) -> (i32, i32) {
    %c0_i32 = arith.constant 0 : i32
    %c0_i32_0 = arith.constant 0 : i32
    return %arg0, %c0_i32 : i32, i32
  }
  func.func @transform_1(%arg0: i32) -> (i32, i32) {
    %c0_i32 = arith.constant 0 : i32
    %c0_i32_0 = arith.constant 0 : i32
    %c0_i32_1 = arith.constant 0 : i32
    return %c0_i32, %c0_i32_0 : i32, i32
  }
  func.func @transform_2(%arg0: i32) -> (i32, i32) {
    %c0_i32 = arith.constant 0 : i32
    %c0_i32_0 = arith.constant 0 : i32
    %c0_i32_1 = arith.constant 0 : i32
    return %c0_i32, %c0_i32_0 : i32, i32
  }
  func.func @transform_3(%arg0: i32) -> (i32, i32) {
    %c0_i32 = arith.constant 0 : i32
    %c0_i32_0 = arith.constant 0 : i32
    %c0_i32_1 = arith.constant 0 : i32
    return %c0_i32, %c0_i32_0 : i32, i32
  }
  func.func @transform_4(%arg0: i32) -> (i32, i32) {
    %c0_i32 = arith.constant 0 : i32
    %c0_i32_0 = arith.constant 0 : i32
    %c0_i32_1 = arith.constant 0 : i32
    return %c0_i32, %c0_i32_0 : i32, i32
  }
  func.func @transform_5(%arg0: i32) -> (i32, i32) {
    %c0_i32 = arith.constant 0 : i32
    %c0_i32_0 = arith.constant 0 : i32
    return %arg0, %c0_i32 : i32, i32
  }
}

</mosaic_0001>

<llo_original>
// kernel: tpu_custom_call.1
$region0: #{tpu_custom_call.1}
  #allocation0 [shape = 'u32[]', space=smem, size = 0x4, offset = 0x4, fixed_abs, tag = 'smem constant byte address 0x4 - core index']
  #allocation1 [shape = 'u32[72,128]{1,0:T(1,128)}', space=vmem, size = 0x9000, scoped, tag = 'internal scratch']
  %s0 = inlined_call_operand.vmem [shape: f32[2,8], index: 0, kind: input, shape index: {}]
  %s1 = inlined_call_operand.vmem [shape: bf16[8,128], index: 1, kind: input, shape index: {}]
  %s2 = inlined_call_operand.vmem [shape: f32[1,128], index: 2, kind: input, shape index: {}]
  %s3 = inlined_call_operand.vmem [shape: bf16[128,15], index: 3, kind: input, shape index: {}]
  %s4 = inlined_call_operand.vmem [shape: f32[3,15], index: 4, kind: input, shape index: {}]
  %s5 = inlined_call_operand.hbm [shape: f32[2,15], index: 5, kind: output, shape index: {}]
  %s6 = sld [smem:[#allocation0]]
  $region30: #{tpu_custom_call.1} parent=0
    _
  %s8 = ssub.s32 1, %s6
  %s9 = scalar_select 0, %s8, %s6
  $region1: #{tpu_custom_call.1} parent=0
    #allocation2 [shape = 'u8[1024]{0}', space=vmem, size = 0x400, scoped, tag = 'output window, operand 0, single buffered']
    #allocation3 [shape = 's32[1]{0}', space=sflag, size = 0x4, scoped, tag = 'scoped memory for tpu_custom_call.1']
    %10 = vsyncpa [#allocation3], 0
    // Predicated region
    $region2: #{tpu_custom_call.1} parent=1 // pred_check
      _
    $region3: #{tpu_custom_call.1} parent=1 // pred_check_branch
      %12 = sbr.rel (0) target = $region5
    $region4: #{tpu_custom_call.1} parent=1 // pred_region
      _
    $region5: #{tpu_custom_call.1} parent=1 // pred_fallthru
      _
    // Predicated region
    $region6: #{tpu_custom_call.1} parent=1 // pred_check
      _
    $region7: #{tpu_custom_call.1} parent=1 // pred_check_branch
      %14 = sbr.rel (0) target = $region9
    $region8: #{tpu_custom_call.1} parent=1 // pred_region
      _
    $region9: #{tpu_custom_call.1} parent=1 // pred_fallthru
      _
    // Predicated region
    $region10: #{tpu_custom_call.1} parent=1 // pred_check
      _
    $region11: #{tpu_custom_call.1} parent=1 // pred_check_branch
      %16 = sbr.rel (0) target = $region13
    $region12: #{tpu_custom_call.1} parent=1 // pred_region
      _
    $region13: #{tpu_custom_call.1} parent=1 // pred_fallthru
      _
    // Predicated region
    $region14: #{tpu_custom_call.1} parent=1 // pred_check
      _
    $region15: #{tpu_custom_call.1} parent=1 // pred_check_branch
      %18 = sbr.rel (0) target = $region17
    $region16: #{tpu_custom_call.1} parent=1 // pred_region
      _
    $region17: #{tpu_custom_call.1} parent=1 // pred_fallthru
      _
    // Predicated region
    $region18: #{tpu_custom_call.1} parent=1 // pred_check
      _
    $region19: #{tpu_custom_call.1} parent=1 // pred_check_branch
      %20 = sbr.rel (0) target = $region21
    $region20: #{tpu_custom_call.1} parent=1 // pred_region
      _
    $region21: #{tpu_custom_call.1} parent=1 // pred_fallthru
      _
    %v22 = vld [vmem:[%s0] sm:$0x3]
    %v23 = vpack.c.bf16 %v22, %v22
    %v24 = vld [vmem:[%s1] sm:$0xf]
    %v25 = vld [vmem:[%s2] sm:$0x1]
    %v27 = vperm.slane %v25, 0
    %vm29 = vcmask 64512
    %v31 = vsel %vm29, %v23, 0
    %vm33 = vcmask 1043456
    %v35 = vsel %vm33, %v24, 0
    %37 = vmatpush.bf16.msra.mxu0 0
    %38 = vmatpush.bf16.msra.mxu0 0
    %39 = vmatpush.bf16.msra.mxu0 0
    %40 = vmatpush.bf16.msra.mxu0 0
    %41 = vmatpush.bf16.msra.mxu0 0
    %42 = vmatpush.bf16.msra.mxu0 0
    %43 = vmatpush.bf16.msra.mxu0 0
    %44 = vmatpush.bf16.msra.mxu0 %v35
    %45 = vmatmul.bf16.gmra.mxu0 %v31
    %v46 = vpop.f32.mrf.mxu0
    %v47 = vadd.f32 %v27, %v46
    %v48 = vpop.f32.mrf.mxu0
    %49 = vdwg.mxu0
    %v50 = vmax.f32 %v47, 0.0
    %v51 = vpack.c.bf16 %v50, %v50
    %v52 = vld [vmem:[%s3] sm:$0xf]
    %v53 = vld [vmem:[%s3 + $0x4] sm:$0xf]
    %v54 = vld [vmem:[%s3 + $0x8] sm:$0xf]
    %v55 = vld [vmem:[%s3 + $0xc] sm:$0xf]
    %v56 = vld [vmem:[%s3 + $0x10] sm:$0xf]
    %v57 = vld [vmem:[%s3 + $0x14] sm:$0xf]
    %v58 = vld [vmem:[%s3 + $0x18] sm:$0xf]
    %v59 = vld [vmem:[%s3 + $0x1c] sm:$0xf]
    %v60 = vld [vmem:[%s3 + $0x20] sm:$0xf]
    %v61 = vld [vmem:[%s3 + $0x24] sm:$0xf]
    %v62 = vld [vmem:[%s3 + $0x28] sm:$0xf]
    %v63 = vld [vmem:[%s3 + $0x2c] sm:$0xf]
    %v64 = vld [vmem:[%s3 + $0x30] sm:$0xf]
    %v65 = vld [vmem:[%s3 + $0x34] sm:$0xf]
    %v66 = vld [vmem:[%s3 + $0x38] sm:$0xf]
    %v67 = vld [vmem:[%s3 + $0x3c] sm:$0xf]
    %v68 = vld [vmem:[%s4] sm:$0x1]
    %v69 = vperm.slane %v68, 0
    %v86 = vunpack.c.l.b16 %v52
    %v87 = vunpack.c.l.b16 %v53
    %v88 = vunpack.c.l.b16 %v54
    %v89 = vunpack.c.l.b16 %v55
    %v90 = vunpack.c.l.b16 %v56
    %v91 = vunpack.c.l.b16 %v57
    %v92 = vunpack.c.l.b16 %v58
    %v93 = vunpack.c.l.b16 %v59
    %v94 = vunpack.c.l.b16 %v60
    %v95 = vunpack.c.l.b16 %v61
    %v96 = vunpack.c.l.b16 %v62
    %v97 = vunpack.c.l.b16 %v63
    %v98 = vunpack.c.l.b16 %v64
    %v99 = vunpack.c.l.b16 %v65
    %v100 = vunpack.c.l.b16 %v66
    %v101 = vunpack.c.l.b16 %v67
    %v102 = vpack.c.b16 %v87, %v86
    %v103 = vpack.c.b16 %v89, %v88
    %v104 = vpack.c.b16 %v91, %v90
    %v105 = vpack.c.b16 %v93, %v92
    %v106 = vpack.c.b16 %v95, %v94
    %v107 = vpack.c.b16 %v97, %v96
    %v108 = vpack.c.b16 %v99, %v98
    %v109 = vpack.c.b16 %v101, %v100
    %118 = vmatpush.bf16.msra.mxu0 %v109
    %119 = vmatpush.bf16.msra.mxu0 %v108
    %120 = vmatpush.bf16.msra.mxu0 %v107
    %121 = vmatpush.bf16.msra.mxu0 %v106
    %122 = vmatpush.bf16.msra.mxu0 %v105
    %123 = vmatpush.bf16.msra.mxu0 %v104
    %124 = vmatpush.bf16.msra.mxu0 %v103
    %125 = vmatpush.bf16.msra.mxu0 %v102
    %126 = vmatmul.bf16.gmra.mxu0 %v51
    %v127 = vpop.f32.mrf.mxu0
    %v128 = vadd.f32 %v69, %v127
    %v129 = vpop.f32.mrf.mxu0
    %130 = vdwg.mxu0
    %v131 = vld [vmem:[%s4 + $0x1] sm:$0x1]
    %v132 = vperm.slane %v131, 0
    %v133 = vmax.f32 %v128, %v132
    %v134 = vld [vmem:[%s4 + $0x2] sm:$0x1]
    %v135 = vperm.slane %v134, 0
    %v136 = vmin.f32 %v133, %v135
    %vm137 = vcmask 115712
    %138 = vst.msk [vmem:[#allocation2] sm:$0x3] %vm137, %v136
    // Predicated region
    $region22: #{tpu_custom_call.1} parent=1 // pred_check
      _
    $region23: #{tpu_custom_call.1} parent=1 // pred_check_branch
      %140 = sbr.rel (0) target = $region25
    $region24: #{tpu_custom_call.1} parent=1 // pred_region
      %142 = vsyncadd [#allocation3], 0
      %s144 = sshll.u32 [#allocation2], 4
      %s145 = int_to_ptr.vmem [resolvable:$true] %s144
      %s146 = sshll.u32 %s5, 4
      %s147 = int_to_ptr.hbm [resolvable:$true] %s146
      %149 = dma.vmem_to_hbm [thread:$0]  %s145, 32, %s147, [#allocation3]
    $region25: #{tpu_custom_call.1} parent=1 // pred_fallthru
      _
    // Predicated region
    $region26: #{tpu_custom_call.1} parent=1 // pred_check
      _
    $region27: #{tpu_custom_call.1} parent=1 // pred_check_branch
      %151 = sbr.rel (0) target = $region29
    $region28: #{tpu_custom_call.1} parent=1 // pred_region
      %153 = dma.done [#allocation3], 32
    $region29: #{tpu_custom_call.1} parent=1 // pred_fallthru
      _
    %154 = vsyncpa [#allocation3], 1

</llo_original>
